<compile_context>
chip_gen: v7x
topology: tpu7x:2x2x1
jax: 0.10.0
libtpu: 0.0.40
codegen_flags: <defaults>
</compile_context>

<pallas_src>
import functools

import jax
import jax.numpy as jnp
from jax.experimental import pallas as pl
from jax.experimental.pallas import tpu as pltpu


# -----------------------------------------------------------------------------
# Kernel body (shared by the packed path and the raw fallback path).
# -----------------------------------------------------------------------------
def _qhead_kernel(const_ref, a_ref, b_ref, wa_ref, wb_ref, out_ref, *, precision):
    # const_ref: (1, 1)     SMEM  folded degree-0 term: sum(W[0, :D]) + bias
    # a_ref:     (Ta, Ka)   VMEM  obs tile   (packed lane-dense or raw)
    # b_ref:     (Ta, Kb)   VMEM  act tile
    # wa_ref:    (Ka, N)    VMEM  selector / column weight (resident block)
    # wb_ref:    (Kb, N)    VMEM  selector / column weight (resident block)
    # out_ref:   (Ta, N)    VMEM  q values
    q = jnp.dot(a_ref[...], wa_ref[...],
                preferred_element_type=jnp.float32, precision=precision)
    q = q + jnp.dot(b_ref[...], wb_ref[...],
                    preferred_element_type=jnp.float32, precision=precision)
    out_ref[...] = (q + const_ref[0, 0]).astype(out_ref.dtype)


# -----------------------------------------------------------------------------
# Wrapper helpers.
# -----------------------------------------------------------------------------
def _round_up(x, m):
    return ((x + m - 1) // m) * m


def _pick_tile(batch_rows, gran, target_rows):
    """Batch rows per grid step: multiple of `gran`, capped near `target_rows`,
    preferring >= 2 grid steps so v7x can use both TensorCores."""
    if batch_rows <= gran:
        return batch_rows                      # single full block
    cap = max(gran, (target_rows // gran) * gran)
    half = _round_up(-(-batch_rows // 2), gran)  # ceil(B/2) rounded to granularity
    return max(gran, min(cap, half))


def _selector(w_row, pack, dtype):
    """(dim,) -> (pack*dim, pack) block-diagonal selector.

    Column j holds w_row in rows j*dim:(j+1)*dim, zeros elsewhere, so that
    packed_block @ selector computes one dot(x_row, w_row) per packed sub-row.
    """
    dim = w_row.shape[0]
    eye = jnp.eye(pack, dtype=jnp.float32)                                # (pack, pack)
    sel = eye[:, None, :] * w_row.astype(jnp.float32)[None, :, None]      # (pack, dim, pack)
    return sel.reshape(pack * dim, pack).astype(dtype)


# -----------------------------------------------------------------------------
# Forward pass.
# -----------------------------------------------------------------------------
def action_value_forward(obs, act, weight, bias, *,
                         packed_tile_rows=16384,
                         raw_tile_rows=8192,
                         small_batch_threshold=512,
                         force_path=None):
    """obs: (B, obs_dim), act: (B, act_dim), weight: (1, 2*(obs_dim+act_dim)), bias: (1,).

    force_path: None (auto) | "jnp" | "kernel" | "packed" | "raw".
    """
    B, obs_dim = obs.shape
    Ba, act_dim = act.shape
    assert Ba == B, (obs.shape, act.shape)
    D = obs_dim + act_dim
    assert weight.shape == (1, 2 * D), weight.shape
    assert bias.shape == (1,), bias.shape

    # Fold the degree-0 (ones) half of the feature vector into one scalar.
    const = (jnp.sum(weight[0, :D].astype(jnp.float32))
             + bias.astype(jnp.float32)[0]).reshape(1, 1)          # (1, 1) -> SMEM
    w_obs = weight[0, D:D + obs_dim]                               # (obs_dim,)
    w_act = weight[0, D + obs_dim:]                                # (act_dim,)

    # Pack factor: enough consecutive batch rows per packed row to fill >=128 lanes.
    pack = max(1, -(-128 // max(1, min(obs_dim, act_dim))))

    # Dispatch.
    if force_path == "jnp" or (force_path is None and B <= small_batch_threshold):
        path = "jnp"
    elif force_path in ("packed", "raw"):
        path = force_path
    else:  # None (large batch) or "kernel"
        path = "packed" if (B % pack == 0) else "raw"

    # Full-f32 contraction when inputs are f32 (matches the PyTorch reference);
    # bf16 inputs use the native bf16 MXU path with f32 accumulation.
    dot_precision = (jax.lax.Precision.HIGHEST
                     if (obs.dtype == jnp.float32 and act.dtype == jnp.float32)
                     else jax.lax.Precision.DEFAULT)

    if path == "jnp":
        # Tiny batches: a standalone pallas_call is dominated by dispatch +
        # pipeline-prologue overhead -- let XLA fuse it instead.
        q = (jnp.dot(obs.astype(jnp.float32), w_obs.astype(jnp.float32),
                     precision=jax.lax.Precision.HIGHEST)
             + jnp.dot(act.astype(jnp.float32), w_act.astype(jnp.float32),
                       precision=jax.lax.Precision.HIGHEST)
             + const[0, 0])
        return q

    kernel = functools.partial(_qhead_kernel, precision=dot_precision)
    compiler_params = pltpu.CompilerParams(
        dimension_semantics=("parallel",),
        vmem_limit_bytes=32 * 1024 * 1024,
    )

    if path == "packed":
        # Lane-dense layout: (B, dim) -> (B/pack, pack*dim), free contiguous reshape.
        assert B % pack == 0
        n_packed = B // pack
        w_o = pack * obs_dim
        w_a = pack * act_dim
        obs_p = obs.reshape(n_packed, w_o)
        act_p = act.reshape(n_packed, w_a)
        s_obs = _selector(w_obs, pack, obs.dtype)                  # (pack*obs_dim, pack)
        s_act = _selector(w_act, pack, act.dtype)                  # (pack*act_dim, pack)

        tb = _pick_tile(B, 8 * pack, packed_tile_rows)             # batch rows per step
        tbp = tb // pack                                           # packed rows per step
        grid = (pl.cdiv(n_packed, tbp),)

        q = pl.pallas_call(
            kernel,
            out_shape=jax.ShapeDtypeStruct((n_packed, pack), jnp.float32),
            grid=grid,
            in_specs=[
                pl.BlockSpec(memory_space=pltpu.MemorySpace.SMEM),  # const scalar
                pl.BlockSpec((tbp, w_o), lambda i: (i, 0)),         # packed obs tile
                pl.BlockSpec((tbp, w_a), lambda i: (i, 0)),         # packed act tile
                pl.BlockSpec((w_o, pack), lambda i: (0, 0)),        # obs selector (resident)
                pl.BlockSpec((w_a, pack), lambda i: (0, 0)),        # act selector (resident)
            ],
            out_specs=pl.BlockSpec((tbp, pack), lambda i: (i, 0)),
            compiler_params=compiler_params,
        )(const, obs_p, act_p, s_obs, s_act)
        return q.reshape(B)

    # "raw" fallback: B not divisible by the pack factor.  Still routes the
    # reduction through the MXU (column weights) and uses large tiles.
    wo_col = w_obs.reshape(obs_dim, 1).astype(obs.dtype)
    wa_col = w_act.reshape(act_dim, 1).astype(act.dtype)
    tb = _pick_tile(B, 8, raw_tile_rows)
    grid = (pl.cdiv(B, tb),)

    q = pl.pallas_call(
        kernel,
        out_shape=jax.ShapeDtypeStruct((B, 1), jnp.float32),
        grid=grid,
        in_specs=[
            pl.BlockSpec(memory_space=pltpu.MemorySpace.SMEM),      # const scalar
            pl.BlockSpec((tb, obs_dim), lambda i: (i, 0)),          # obs batch tile
            pl.BlockSpec((tb, act_dim), lambda i: (i, 0)),          # act batch tile
            pl.BlockSpec((obs_dim, 1), lambda i: (0, 0)),           # w_obs column (resident)
            pl.BlockSpec((act_dim, 1), lambda i: (0, 0)),           # w_act column (resident)
        ],
        out_specs=pl.BlockSpec((tb, 1), lambda i: (i, 0)),
        compiler_params=compiler_params,
    )(const, obs, act, wo_col, wa_col)
    return q.reshape(B)


# -----------------------------------------------------------------------------
# Pure-JAX reference (exact PyTorch semantics: feat = [ones | x], then Linear).
# -----------------------------------------------------------------------------
def reference_forward(obs, act, weight, bias):
    x = jnp.concatenate([obs.astype(jnp.float32), act.astype(jnp.float32)], axis=-1)
    feat = jnp.concatenate([jnp.ones_like(x), x], axis=-1)
    q = jnp.dot(feat, weight.astype(jnp.float32).T,
                precision=jax.lax.Precision.HIGHEST) + bias.astype(jnp.float32)
    return jnp.squeeze(q, -1)


if __name__ == "__main__":
    obs_dim, act_dim = 16, 16
    degree = 2
    D = obs_dim + act_dim
    in_features = D * degree

    key = jax.random.PRNGKey(0)
    k_w, k_b, k1, k2, k3, k4, k5, k6 = jax.random.split(key, 8)

    # Deterministic PyTorch-style Linear init: uniform(-1/sqrt(fan_in), 1/sqrt(fan_in)).
    bound = 1.0 / float(in_features) ** 0.5
    weight = jax.random.uniform(k_w, (1, in_features), jnp.float32, -bound, bound)
    bias = jax.random.uniform(k_b, (1,), jnp.float32, -bound, bound)

    def check(batch, k_o, k_a, force_path):
        obs = jax.random.normal(k_o, (batch, obs_dim), dtype=jnp.float32)
        act = jax.random.normal(k_a, (batch, act_dim), dtype=jnp.float32)
        q = action_value_forward(obs, act, weight, bias, force_path=force_path)
        q = jax.block_until_ready(q)
        q_ref = reference_forward(obs, act, weight, bias)
        assert q.shape == (batch,), q.shape
        err = float(jnp.max(jnp.abs(q - q_ref)))
        assert jnp.allclose(q, q_ref, atol=1e-4, rtol=1e-4), err

    # 1) Tiny batch forced through the Pallas kernel (packed path, single block).
    check(8, k1, k2, force_path="kernel")
    # 2) Tiny batch through the auto-dispatched fused-XLA small-batch path.
    check(8, k1, k2, force_path=None)
    # 3) Medium divisible batch: lane-dense packed path, >=2 "parallel" grid steps.
    check(4096, k3, k4, force_path=None)
    # 4) Non-divisible batch: raw fallback path with a padded partial last block.
    check(2050, k5, k6, force_path=None)

    print("KERNEL_OK")
</pallas_src>

<mosaic_0001>
module attributes {stable_mosaic.version = 11 : i64} {
  func.func @_qhead_kernel(%arg0: i32, %arg1: memref<1x1xf32, #tpu.memory_space<smem>>, %arg2: memref<1x128xf32, #tpu.memory_space<vmem>>, %arg3: memref<1x128xf32, #tpu.memory_space<vmem>>, %arg4: memref<128x8xf32, #tpu.memory_space<vmem>>, %arg5: memref<128x8xf32, #tpu.memory_space<vmem>>, %arg6: memref<1x8xf32, #tpu.memory_space<vmem>>) attributes {dimension_semantics = [#tpu.dimension_semantics<parallel>], iteration_bounds = array<i64: 1>, scalar_prefetch = 0 : i64, scratch_operands = 0 : i64, tpu.core_type = #tpu.core_type<tc>, window_params = [{transform_indices = @transform_0, window_bounds = array<i64: 1, 1>}, {transform_indices = @transform_1, window_bounds = array<i64: 1, 128>}, {transform_indices = @transform_2, window_bounds = array<i64: 1, 128>}, {pipeline_mode = #tpu.pipeline_mode<synchronous>, transform_indices = @transform_3, window_bounds = array<i64: 128, 8>}, {pipeline_mode = #tpu.pipeline_mode<synchronous>, transform_indices = @transform_4, window_bounds = array<i64: 128, 8>}, {transform_indices = @transform_5, window_bounds = array<i64: 1, 8>}]} {
    %c0 = arith.constant 0 : index
    %c0_0 = arith.constant 0 : index
    %0 = vector.load %arg2[%c0, %c0_0] : memref<1x128xf32, #tpu.memory_space<vmem>>, vector<1x128xf32>
    %c0_1 = arith.constant 0 : index
    %c0_2 = arith.constant 0 : index
    %1 = vector.load %arg4[%c0_1, %c0_2] : memref<128x8xf32, #tpu.memory_space<vmem>>, vector<128x8xf32>
    %cst = arith.constant dense<0.000000e+00> : vector<1x8xf32>
    %2 = tpu.matmul %0, %1, %cst {dimension_numbers = #tpu.dot_dimension_numbers<[1], [0], [0], [1], [0, 0, 1, 1], [], []>, precision = #tpu.contract_precision<fp32>} : vector<1x128xf32>, vector<128x8xf32>, vector<1x8xf32> -> vector<1x8xf32>
    %c0_3 = arith.constant 0 : index
    %c0_4 = arith.constant 0 : index
    %3 = vector.load %arg3[%c0_3, %c0_4] : memref<1x128xf32, #tpu.memory_space<vmem>>, vector<1x128xf32>
    %c0_5 = arith.constant 0 : index
    %c0_6 = arith.constant 0 : index
    %4 = vector.load %arg5[%c0_5, %c0_6] : memref<128x8xf32, #tpu.memory_space<vmem>>, vector<128x8xf32>
    %cst_7 = arith.constant dense<0.000000e+00> : vector<1x8xf32>
    %5 = tpu.matmul %3, %4, %cst_7 {dimension_numbers = #tpu.dot_dimension_numbers<[1], [0], [0], [1], [0, 0, 1, 1], [], []>, precision = #tpu.contract_precision<fp32>} : vector<1x128xf32>, vector<128x8xf32>, vector<1x8xf32> -> vector<1x8xf32>
    %6 = arith.addf %2, %5 : vector<1x8xf32>
    %c0_8 = arith.constant 0 : index
    %c0_9 = arith.constant 0 : index
    %7 = memref.load %arg1[%c0_8, %c0_9] : memref<1x1xf32, #tpu.memory_space<smem>>
    %8 = vector.broadcast %7 : f32 to vector<1x8xf32>
    %9 = arith.addf %6, %8 : vector<1x8xf32>
    %c0_10 = arith.constant 0 : index
    %c0_11 = arith.constant 0 : index
    %10 = vector.load %arg6[%c0_10, %c0_11] : memref<1x8xf32, #tpu.memory_space<vmem>>, vector<1x8xf32>
    tpu.vector_store %arg6[%c0_10, %c0_11], %9 {strides = array<i32>} : memref<1x8xf32, #tpu.memory_space<vmem>>, vector<1x8xf32>,
    return
  }
  func.func @transform_0(%arg0: i32) -> (i32, i32) {
    %c0_i32 = arith.constant 0 : i32
    %c0_i32_0 = arith.constant 0 : i32
    %c0_i32_1 = arith.constant 0 : i32
    return %c0_i32, %c0_i32_0 : i32, i32
  }
  func.func @transform_1(%arg0: i32) -> (i32, i32) {
    %c0_i32 = arith.constant 0 : i32
    %c0_i32_0 = arith.constant 0 : i32
    return %arg0, %c0_i32 : i32, i32
  }
  func.func @transform_2(%arg0: i32) -> (i32, i32) {
    %c0_i32 = arith.constant 0 : i32
    %c0_i32_0 = arith.constant 0 : i32
    return %arg0, %c0_i32 : i32, i32
  }
  func.func @transform_3(%arg0: i32) -> (i32, i32) {
    %c0_i32 = arith.constant 0 : i32
    %c0_i32_0 = arith.constant 0 : i32
    %c0_i32_1 = arith.constant 0 : i32
    return %c0_i32, %c0_i32_0 : i32, i32
  }
  func.func @transform_4(%arg0: i32) -> (i32, i32) {
    %c0_i32 = arith.constant 0 : i32
    %c0_i32_0 = arith.constant 0 : i32
    %c0_i32_1 = arith.constant 0 : i32
    return %c0_i32, %c0_i32_0 : i32, i32
  }
  func.func @transform_5(%arg0: i32) -> (i32, i32) {
    %c0_i32 = arith.constant 0 : i32
    %c0_i32_0 = arith.constant 0 : i32
    return %arg0, %c0_i32 : i32, i32
  }
}

</mosaic_0001>

<llo_original>
// kernel: tpu_custom_call.1
$region0: #{tpu_custom_call.1}
  #allocation0 [shape = 'u32[]', space=smem, size = 0x4, offset = 0x4, fixed_abs, tag = 'smem constant byte address 0x4 - core index']
  #allocation1 [shape = 'u32[144,128]{1,0:T(1,128)}', space=vmem, size = 0x12000, scoped, tag = 'internal scratch']
  #allocation2 [shape = 'f32[1,1]{1,0:T(1,128)S(6)}', space=smem, size = 0x200, scoped, tag = 'scoped memory for tpu_custom_call.1']
  %s0 = inlined_call_operand.<no memory space> [shape: f32[1,1], index: 0, kind: input, shape index: {}]
  %s1 = inlined_call_operand.vmem [shape: f32[1,128], index: 1, kind: input, shape index: {}]
  %s2 = inlined_call_operand.vmem [shape: f32[1,128], index: 2, kind: input, shape index: {}]
  %s3 = inlined_call_operand.vmem [shape: f32[128,8], index: 3, kind: input, shape index: {}]
  %s4 = inlined_call_operand.vmem [shape: f32[128,8], index: 4, kind: input, shape index: {}]
  %s5 = inlined_call_operand.hbm [shape: f32[1,8], index: 5, kind: output, shape index: {}]
  %s6 = sld [smem:[#allocation0]]
  $region30: #{tpu_custom_call.1} parent=0
    _
  %s8 = ssub.s32 1, %s6
  %s9 = scalar_select 0, %s8, %s6
  %10 = sst [smem:[#allocation2]] %s0
  $region1: #{tpu_custom_call.1} parent=0
    #allocation3 [shape = 'u8[512]{0}', space=vmem, size = 0x400, scoped, tag = 'output window, operand 0, single buffered']
    #allocation4 [shape = 's32[1]{0}', space=sflag, size = 0x4, scoped, tag = 'scoped memory for tpu_custom_call.1']
    %11 = vsyncpa [#allocation4], 0
    // Predicated region
    $region2: #{tpu_custom_call.1} parent=1 // pred_check
      _
    $region3: #{tpu_custom_call.1} parent=1 // pred_check_branch
      %13 = sbr.rel (0) target = $region5
    $region4: #{tpu_custom_call.1} parent=1 // pred_region
      _
    $region5: #{tpu_custom_call.1} parent=1 // pred_fallthru
      _
    // Predicated region
    $region6: #{tpu_custom_call.1} parent=1 // pred_check
      _
    $region7: #{tpu_custom_call.1} parent=1 // pred_check_branch
      %15 = sbr.rel (0) target = $region9
    $region8: #{tpu_custom_call.1} parent=1 // pred_region
      _
    $region9: #{tpu_custom_call.1} parent=1 // pred_fallthru
      _
    // Predicated region
    $region10: #{tpu_custom_call.1} parent=1 // pred_check
      _
    $region11: #{tpu_custom_call.1} parent=1 // pred_check_branch
      %17 = sbr.rel (0) target = $region13
    $region12: #{tpu_custom_call.1} parent=1 // pred_region
      _
    $region13: #{tpu_custom_call.1} parent=1 // pred_fallthru
      _
    // Predicated region
    $region14: #{tpu_custom_call.1} parent=1 // pred_check
      _
    $region15: #{tpu_custom_call.1} parent=1 // pred_check_branch
      %19 = sbr.rel (0) target = $region17
    $region16: #{tpu_custom_call.1} parent=1 // pred_region
      _
    $region17: #{tpu_custom_call.1} parent=1 // pred_fallthru
      _
    // Predicated region
    $region18: #{tpu_custom_call.1} parent=1 // pred_check
      _
    $region19: #{tpu_custom_call.1} parent=1 // pred_check_branch
      %21 = sbr.rel (0) target = $region21
    $region20: #{tpu_custom_call.1} parent=1 // pred_region
      _
    $region21: #{tpu_custom_call.1} parent=1 // pred_fallthru
      _
    %v22 = vld [vmem:[%s1] sm:$0x1]
    %v23 = vld [vmem:[%s3] sm:$0xff]
    %v24 = vld [vmem:[%s3 + $0x8] sm:$0xff]
    %v25 = vld [vmem:[%s3 + $0x10] sm:$0xff]
    %v26 = vld [vmem:[%s3 + $0x18] sm:$0xff]
    %v27 = vld [vmem:[%s3 + $0x20] sm:$0xff]
    %v28 = vld [vmem:[%s3 + $0x28] sm:$0xff]
    %v29 = vld [vmem:[%s3 + $0x30] sm:$0xff]
    %v30 = vld [vmem:[%s3 + $0x38] sm:$0xff]
    %v31 = vld [vmem:[%s3 + $0x40] sm:$0xff]
    %v32 = vld [vmem:[%s3 + $0x48] sm:$0xff]
    %v33 = vld [vmem:[%s3 + $0x50] sm:$0xff]
    %v34 = vld [vmem:[%s3 + $0x58] sm:$0xff]
    %v35 = vld [vmem:[%s3 + $0x60] sm:$0xff]
    %v36 = vld [vmem:[%s3 + $0x68] sm:$0xff]
    %v37 = vld [vmem:[%s3 + $0x70] sm:$0xff]
    %v38 = vld [vmem:[%s3 + $0x78] sm:$0xff]
    %v39 = vld [vmem:[%s2] sm:$0x1]
    %v40 = vld [vmem:[%s4] sm:$0xff]
    %v41 = vld [vmem:[%s4 + $0x8] sm:$0xff]
    %v42 = vld [vmem:[%s4 + $0x10] sm:$0xff]
    %v43 = vld [vmem:[%s4 + $0x18] sm:$0xff]
    %v44 = vld [vmem:[%s4 + $0x20] sm:$0xff]
    %v45 = vld [vmem:[%s4 + $0x28] sm:$0xff]
    %v46 = vld [vmem:[%s4 + $0x30] sm:$0xff]
    %v47 = vld [vmem:[%s4 + $0x38] sm:$0xff]
    %v48 = vld [vmem:[%s4 + $0x40] sm:$0xff]
    %v49 = vld [vmem:[%s4 + $0x48] sm:$0xff]
    %v50 = vld [vmem:[%s4 + $0x50] sm:$0xff]
    %v51 = vld [vmem:[%s4 + $0x58] sm:$0xff]
    %v52 = vld [vmem:[%s4 + $0x60] sm:$0xff]
    %v53 = vld [vmem:[%s4 + $0x68] sm:$0xff]
    %v54 = vld [vmem:[%s4 + $0x70] sm:$0xff]
    %v55 = vld [vmem:[%s4 + $0x78] sm:$0xff]
    %56 = vmatprep.subr.mxu0 0.0
    %v57 = vand.u32 %v40, 4294901760
    %58 = vmatpush1.msra.mxu0 %v57
    %59 = vmatprep.subr.mxu0 0.0
    %v60 = vand.u32 %v41, 4294901760
    %61 = vmatpush1.msra.mxu0 %v60
    %62 = vmatprep.subr.mxu0 0.0
    %v63 = vand.u32 %v42, 4294901760
    %64 = vmatpush1.msra.mxu0 %v63
    %65 = vmatprep.subr.mxu0 0.0
    %v66 = vand.u32 %v43, 4294901760
    %67 = vmatpush1.msra.mxu0 %v66
    %68 = vmatprep.subr.mxu0 0.0
    %v69 = vand.u32 %v44, 4294901760
    %70 = vmatpush1.msra.mxu0 %v69
    %71 = vmatprep.subr.mxu0 0.0
    %v72 = vand.u32 %v45, 4294901760
    %73 = vmatpush1.msra.mxu0 %v72
    %74 = vmatprep.subr.mxu0 0.0
    %v75 = vand.u32 %v46, 4294901760
    %76 = vmatpush1.msra.mxu0 %v75
    %77 = vmatprep.subr.mxu0 0.0
    %v78 = vand.u32 %v47, 4294901760
    %79 = vmatpush1.msra.mxu0 %v78
    %80 = vmatprep.subr.mxu0 0.0
    %v81 = vand.u32 %v48, 4294901760
    %82 = vmatpush1.msra.mxu0 %v81
    %83 = vmatprep.subr.mxu0 0.0
    %v84 = vand.u32 %v49, 4294901760
    %85 = vmatpush1.msra.mxu0 %v84
    %86 = vmatprep.subr.mxu0 0.0
    %v87 = vand.u32 %v50, 4294901760
    %88 = vmatpush1.msra.mxu0 %v87
    %89 = vmatprep.subr.mxu0 0.0
    %v90 = vand.u32 %v51, 4294901760
    %91 = vmatpush1.msra.mxu0 %v90
    %92 = vmatprep.subr.mxu0 0.0
    %v93 = vand.u32 %v52, 4294901760
    %94 = vmatpush1.msra.mxu0 %v93
    %95 = vmatprep.subr.mxu0 0.0
    %v96 = vand.u32 %v53, 4294901760
    %97 = vmatpush1.msra.mxu0 %v96
    %98 = vmatprep.subr.mxu0 0.0
    %v99 = vand.u32 %v54, 4294901760
    %100 = vmatpush1.msra.mxu0 %v99
    %101 = vmatprep.subr.mxu0 0.0
    %v102 = vand.u32 %v55, 4294901760
    %103 = vmatpush1.msra.mxu0 %v102
    %104 = vmatprep.subr.mxu0 0.0
    %105 = vmatpush1.msra.mxu0 0.0
    %106 = vmatprep.subr.mxu0 0.0
    %107 = vmatpush1.msra.mxu0 0.0
    %108 = vmatprep.subr.mxu0 0.0
    %109 = vmatpush1.msra.mxu0 0.0
    %110 = vmatprep.subr.mxu0 0.0
    %111 = vmatpush1.msra.mxu0 0.0
    %112 = vmatprep.subr.mxu0 0.0
    %113 = vmatpush1.msra.mxu0 0.0
    %114 = vmatprep.subr.mxu0 0.0
    %115 = vmatpush1.msra.mxu0 0.0
    %116 = vmatprep.subr.mxu0 0.0
    %117 = vmatpush1.msra.mxu0 0.0
    %118 = vmatprep.subr.mxu0 0.0
    %119 = vmatpush1.msra.mxu0 0.0
    %120 = vmatprep.subr.mxu0 0.0
    %121 = vmatpush1.msra.mxu0 0.0
    %122 = vmatprep.subr.mxu0 0.0
    %123 = vmatpush1.msra.mxu0 0.0
    %124 = vmatprep.subr.mxu0 0.0
    %125 = vmatpush1.msra.mxu0 0.0
    %126 = vmatprep.subr.mxu0 0.0
    %127 = vmatpush1.msra.mxu0 0.0
    %128 = vmatprep.subr.mxu0 0.0
    %129 = vmatpush1.msra.mxu0 0.0
    %130 = vmatprep.subr.mxu0 0.0
    %131 = vmatpush1.msra.mxu0 0.0
    %132 = vmatprep.subr.mxu0 0.0
    %133 = vmatpush1.msra.mxu0 0.0
    %134 = vmatprep.subr.mxu0 0.0
    %135 = vmatpush1.msra.mxu0 0.0
    %136 = vmatprep.mubr.f32.mxu0 0.0
    %v137 = vand.u32 %v39, 4294901760
    %v138 = vsub.f32 %v39, %v137
    %v139 = vand.u32 %v138, 4294901760
    %v140 = vsub.f32 %v138, %v139
    %v141 = vand.u32 %v140, 4294901760
    %142 = vmatmul.mubr.f32.gmra.mrb[0].mxu0 %v141
    %v143 = vpop.f32.mrb[0].mxu0
    %v144 = vadd.f32 0.0, %v143
    %v145 = vpop.f32.mrb[0].mxu0
    %146 = vdwg.mxu0
    %147 = vmatprep.subr.mxu0 0.0
    %v148 = vand.u32 %v40, 4294901760
    %v149 = vsub.f32 %v40, %v148
    %v150 = vand.u32 %v149, 4294901760
    %v151 = vsub.f32 %v149, %v150
    %v152 = vand.u32 %v151, 4294901760
    %153 = vmatpush1.msra.mxu0 %v152
    %154 = vmatprep.subr.mxu0 0.0
    %v155 = vand.u32 %v41, 4294901760
    %v156 = vsub.f32 %v41, %v155
    %v157 = vand.u32 %v156, 4294901760
    %v158 = vsub.f32 %v156, %v157
    %v159 = vand.u32 %v158, 4294901760
    %160 = vmatpush1.msra.mxu0 %v159
    %161 = vmatprep.subr.mxu0 0.0
    %v162 = vand.u32 %v42, 4294901760
    %v163 = vsub.f32 %v42, %v162
    %v164 = vand.u32 %v163, 4294901760
    %v165 = vsub.f32 %v163, %v164
    %v166 = vand.u32 %v165, 4294901760
    %167 = vmatpush1.msra.mxu0 %v166
    %168 = vmatprep.subr.mxu0 0.0
    %v169 = vand.u32 %v43, 4294901760
    %v170 = vsub.f32 %v43, %v169
    %v171 = vand.u32 %v170, 4294901760
    %v172 = vsub.f32 %v170, %v171
    %v173 = vand.u32 %v172, 4294901760
    %174 = vmatpush1.msra.mxu0 %v173
    %175 = vmatprep.subr.mxu0 0.0
    %v176 = vand.u32 %v44, 4294901760
    %v177 = vsub.f32 %v44, %v176
    %v178 = vand.u32 %v177, 4294901760
    %v179 = vsub.f32 %v177, %v178
    %v180 = vand.u32 %v179, 4294901760
    %181 = vmatpush1.msra.mxu0 %v180
    %182 = vmatprep.subr.mxu0 0.0
    %v183 = vand.u32 %v45, 4294901760
    %v184 = vsub.f32 %v45, %v183
    %v185 = vand.u32 %v184, 4294901760
    %v186 = vsub.f32 %v184, %v185
    %v187 = vand.u32 %v186, 4294901760
    %188 = vmatpush1.msra.mxu0 %v187
    %189 = vmatprep.subr.mxu0 0.0
    %v190 = vand.u32 %v46, 4294901760
    %v191 = vsub.f32 %v46, %v190
    %v192 = vand.u32 %v191, 4294901760
    %v193 = vsub.f32 %v191, %v192
    %v194 = vand.u32 %v193, 4294901760
    %195 = vmatpush1.msra.mxu0 %v194
    %196 = vmatprep.subr.mxu0 0.0
    %v197 = vand.u32 %v47, 4294901760
    %v198 = vsub.f32 %v47, %v197
    %v199 = vand.u32 %v198, 4294901760
    %v200 = vsub.f32 %v198, %v199
    %v201 = vand.u32 %v200, 4294901760
    %202 = vmatpush1.msra.mxu0 %v201
    %203 = vmatprep.subr.mxu0 0.0
    %v204 = vand.u32 %v48, 4294901760
    %v205 = vsub.f32 %v48, %v204
    %v206 = vand.u32 %v205, 4294901760
    %v207 = vsub.f32 %v205, %v206
    %v208 = vand.u32 %v207, 4294901760
    %209 = vmatpush1.msra.mxu0 %v208
    %210 = vmatprep.subr.mxu0 0.0
    %v211 = vand.u32 %v49, 4294901760
    %v212 = vsub.f32 %v49, %v211
    %v213 = vand.u32 %v212, 4294901760
    %v214 = vsub.f32 %v212, %v213
    %v215 = vand.u32 %v214, 4294901760
    %216 = vmatpush1.msra.mxu0 %v215
    %217 = vmatprep.subr.mxu0 0.0
    %v218 = vand.u32 %v50, 4294901760
    %v219 = vsub.f32 %v50, %v218
    %v220 = vand.u32 %v219, 4294901760
    %v221 = vsub.f32 %v219, %v220
    %v222 = vand.u32 %v221, 4294901760
    %223 = vmatpush1.msra.mxu0 %v222
    %224 = vmatprep.subr.mxu0 0.0
    %v225 = vand.u32 %v51, 4294901760
    %v226 = vsub.f32 %v51, %v225
    %v227 = vand.u32 %v226, 4294901760
    %v228 = vsub.f32 %v226, %v227
    %v229 = vand.u32 %v228, 4294901760
    %230 = vmatpush1.msra.mxu0 %v229
    %231 = vmatprep.subr.mxu0 0.0
    %v232 = vand.u32 %v52, 4294901760
    %v233 = vsub.f32 %v52, %v232
    %v234 = vand.u32 %v233, 4294901760
    %v235 = vsub.f32 %v233, %v234
    %v236 = vand.u32 %v235, 4294901760
    %237 = vmatpush1.msra.mxu0 %v236
    %238 = vmatprep.subr.mxu0 0.0
    %v239 = vand.u32 %v53, 4294901760
    %v240 = vsub.f32 %v53, %v239
    %v241 = vand.u32 %v240, 4294901760
    %v242 = vsub.f32 %v240, %v241
    %v243 = vand.u32 %v242, 4294901760
    %244 = vmatpush1.msra.mxu0 %v243
    %245 = vmatprep.subr.mxu0 0.0
    %v246 = vand.u32 %v54, 4294901760
    %v247 = vsub.f32 %v54, %v246
    %v248 = vand.u32 %v247, 4294901760
    %v249 = vsub.f32 %v247, %v248
    %v250 = vand.u32 %v249, 4294901760
    %251 = vmatpush1.msra.mxu0 %v250
    %252 = vmatprep.subr.mxu0 0.0
    %v253 = vand.u32 %v55, 4294901760
    %v254 = vsub.f32 %v55, %v253
    %v255 = vand.u32 %v254, 4294901760
    %v256 = vsub.f32 %v254, %v255
    %v257 = vand.u32 %v256, 4294901760
    %258 = vmatpush1.msra.mxu0 %v257
    %259 = vmatprep.subr.mxu0 0.0
    %260 = vmatpush1.msra.mxu0 0.0
    %261 = vmatprep.subr.mxu0 0.0
    %262 = vmatpush1.msra.mxu0 0.0
    %263 = vmatprep.subr.mxu0 0.0
    %264 = vmatpush1.msra.mxu0 0.0
    %265 = vmatprep.subr.mxu0 0.0
    %266 = vmatpush1.msra.mxu0 0.0
    %267 = vmatprep.subr.mxu0 0.0
    %268 = vmatpush1.msra.mxu0 0.0
    %269 = vmatprep.subr.mxu0 0.0
    %270 = vmatpush1.msra.mxu0 0.0
    %271 = vmatprep.subr.mxu0 0.0
    %272 = vmatpush1.msra.mxu0 0.0
    %273 = vmatprep.subr.mxu0 0.0
    %274 = vmatpush1.msra.mxu0 0.0
    %275 = vmatprep.subr.mxu0 0.0
    %276 = vmatpush1.msra.mxu0 0.0
    %277 = vmatprep.subr.mxu0 0.0
    %278 = vmatpush1.msra.mxu0 0.0
    %279 = vmatprep.subr.mxu0 0.0
    %280 = vmatpush1.msra.mxu0 0.0
    %281 = vmatprep.subr.mxu0 0.0
    %282 = vmatpush1.msra.mxu0 0.0
    %283 = vmatprep.subr.mxu0 0.0
    %284 = vmatpush1.msra.mxu0 0.0
    %285 = vmatprep.subr.mxu0 0.0
    %286 = vmatpush1.msra.mxu0 0.0
    %287 = vmatprep.subr.mxu0 0.0
    %288 = vmatpush1.msra.mxu0 0.0
    %289 = vmatprep.subr.mxu0 0.0
    %290 = vmatpush1.msra.mxu0 0.0
    %291 = vmatprep.mubr.f32.mxu0 0.0
    %v292 = vand.u32 %v39, 4294901760
    %293 = vmatmul.mubr.f32.gmra.mrb[0].mxu0 %v292
    %v294 = vpop.f32.mrb[0].mxu0
    %v295 = vadd.f32 %v144, %v294
    %v296 = vpop.f32.mrb[0].mxu0
    %297 = vdwg.mxu0
    %298 = vmatprep.subr.mxu0 0.0
    %v299 = vand.u32 %v40, 4294901760
    %v300 = vsub.f32 %v40, %v299
    %301 = vmatpush1.msra.mxu0 %v300
    %302 = vmatprep.subr.mxu0 0.0
    %v303 = vand.u32 %v41, 4294901760
    %v304 = vsub.f32 %v41, %v303
    %305 = vmatpush1.msra.mxu0 %v304
    %306 = vmatprep.subr.mxu0 0.0
    %v307 = vand.u32 %v42, 4294901760
    %v308 = vsub.f32 %v42, %v307
    %309 = vmatpush1.msra.mxu0 %v308
    %310 = vmatprep.subr.mxu0 0.0
    %v311 = vand.u32 %v43, 4294901760
    %v312 = vsub.f32 %v43, %v311
    %313 = vmatpush1.msra.mxu0 %v312
    %314 = vmatprep.subr.mxu0 0.0
    %v315 = vand.u32 %v44, 4294901760
    %v316 = vsub.f32 %v44, %v315
    %317 = vmatpush1.msra.mxu0 %v316
    %318 = vmatprep.subr.mxu0 0.0
    %v319 = vand.u32 %v45, 4294901760
    %v320 = vsub.f32 %v45, %v319
    %321 = vmatpush1.msra.mxu0 %v320
    %322 = vmatprep.subr.mxu0 0.0
    %v323 = vand.u32 %v46, 4294901760
    %v324 = vsub.f32 %v46, %v323
    %325 = vmatpush1.msra.mxu0 %v324
    %326 = vmatprep.subr.mxu0 0.0
    %v327 = vand.u32 %v47, 4294901760
    %v328 = vsub.f32 %v47, %v327
    %329 = vmatpush1.msra.mxu0 %v328
    %330 = vmatprep.subr.mxu0 0.0
    %v331 = vand.u32 %v48, 4294901760
    %v332 = vsub.f32 %v48, %v331
    %333 = vmatpush1.msra.mxu0 %v332
    %334 = vmatprep.subr.mxu0 0.0
    %v335 = vand.u32 %v49, 4294901760
    %v336 = vsub.f32 %v49, %v335
    %337 = vmatpush1.msra.mxu0 %v336
    %338 = vmatprep.subr.mxu0 0.0
    %v339 = vand.u32 %v50, 4294901760
    %v340 = vsub.f32 %v50, %v339
    %341 = vmatpush1.msra.mxu0 %v340
    %342 = vmatprep.subr.mxu0 0.0
    %v343 = vand.u32 %v51, 4294901760
    %v344 = vsub.f32 %v51, %v343
    %345 = vmatpush1.msra.mxu0 %v344
    %346 = vmatprep.subr.mxu0 0.0
    %v347 = vand.u32 %v52, 4294901760
    %v348 = vsub.f32 %v52, %v347
    %349 = vmatpush1.msra.mxu0 %v348
    %350 = vmatprep.subr.mxu0 0.0
    %v351 = vand.u32 %v53, 4294901760
    %v352 = vsub.f32 %v53, %v351
    %353 = vmatpush1.msra.mxu0 %v352
    %354 = vmatprep.subr.mxu0 0.0
    %v355 = vand.u32 %v54, 4294901760
    %v356 = vsub.f32 %v54, %v355
    %357 = vmatpush1.msra.mxu0 %v356
    %358 = vmatprep.subr.mxu0 0.0
    %v359 = vand.u32 %v55, 4294901760
    %v360 = vsub.f32 %v55, %v359
    %361 = vmatpush1.msra.mxu0 %v360
    %362 = vmatprep.subr.mxu0 0.0
    %363 = vmatpush1.msra.mxu0 0.0
    %364 = vmatprep.subr.mxu0 0.0
    %365 = vmatpush1.msra.mxu0 0.0
    %366 = vmatprep.subr.mxu0 0.0
    %367 = vmatpush1.msra.mxu0 0.0
    %368 = vmatprep.subr.mxu0 0.0
    %369 = vmatpush1.msra.mxu0 0.0
    %370 = vmatprep.subr.mxu0 0.0
    %371 = vmatpush1.msra.mxu0 0.0
    %372 = vmatprep.subr.mxu0 0.0
    %373 = vmatpush1.msra.mxu0 0.0
    %374 = vmatprep.subr.mxu0 0.0
    %375 = vmatpush1.msra.mxu0 0.0
    %376 = vmatprep.subr.mxu0 0.0
    %377 = vmatpush1.msra.mxu0 0.0
    %378 = vmatprep.subr.mxu0 0.0
    %379 = vmatpush1.msra.mxu0 0.0
    %380 = vmatprep.subr.mxu0 0.0
    %381 = vmatpush1.msra.mxu0 0.0
    %382 = vmatprep.subr.mxu0 0.0
    %383 = vmatpush1.msra.mxu0 0.0
    %384 = vmatprep.subr.mxu0 0.0
    %385 = vmatpush1.msra.mxu0 0.0
    %386 = vmatprep.subr.mxu0 0.0
    %387 = vmatpush1.msra.mxu0 0.0
    %388 = vmatprep.subr.mxu0 0.0
    %389 = vmatpush1.msra.mxu0 0.0
    %390 = vmatprep.subr.mxu0 0.0
    %391 = vmatpush1.msra.mxu0 0.0
    %392 = vmatprep.subr.mxu0 0.0
    %393 = vmatpush1.msra.mxu0 0.0
    %394 = vmatprep.mubr.f32.mxu0 0.0
    %v395 = vand.u32 %v39, 4294901760
    %v396 = vsub.f32 %v39, %v395
    %397 = vmatmul.mubr.f32.gmra.mrb[0].mxu0 %v396
    %v398 = vpop.f32.mrb[0].mxu0
    %v399 = vadd.f32 %v295, %v398
    %v400 = vpop.f32.mrb[0].mxu0
    %401 = vdwg.mxu0
    %402 = vmatprep.subr.mxu0 0.0
    %v403 = vand.u32 %v40, 4294901760
    %404 = vmatpush1.msra.mxu0 %v403
    %405 = vmatprep.subr.mxu0 0.0
    %v406 = vand.u32 %v41, 4294901760
    %407 = vmatpush1.msra.mxu0 %v406
    %408 = vmatprep.subr.mxu0 0.0
    %v409 = vand.u32 %v42, 4294901760
    %410 = vmatpush1.msra.mxu0 %v409
    %411 = vmatprep.subr.mxu0 0.0
    %v412 = vand.u32 %v43, 4294901760
    %413 = vmatpush1.msra.mxu0 %v412
    %414 = vmatprep.subr.mxu0 0.0
    %v415 = vand.u32 %v44, 4294901760
    %416 = vmatpush1.msra.mxu0 %v415
    %417 = vmatprep.subr.mxu0 0.0
    %v418 = vand.u32 %v45, 4294901760
    %419 = vmatpush1.msra.mxu0 %v418
    %420 = vmatprep.subr.mxu0 0.0
    %v421 = vand.u32 %v46, 4294901760
    %422 = vmatpush1.msra.mxu0 %v421
    %423 = vmatprep.subr.mxu0 0.0
    %v424 = vand.u32 %v47, 4294901760
    %425 = vmatpush1.msra.mxu0 %v424
    %426 = vmatprep.subr.mxu0 0.0
    %v427 = vand.u32 %v48, 4294901760
    %428 = vmatpush1.msra.mxu0 %v427
    %429 = vmatprep.subr.mxu0 0.0
    %v430 = vand.u32 %v49, 4294901760
    %431 = vmatpush1.msra.mxu0 %v430
    %432 = vmatprep.subr.mxu0 0.0
    %v433 = vand.u32 %v50, 4294901760
    %434 = vmatpush1.msra.mxu0 %v433
    %435 = vmatprep.subr.mxu0 0.0
    %v436 = vand.u32 %v51, 4294901760
    %437 = vmatpush1.msra.mxu0 %v436
    %438 = vmatprep.subr.mxu0 0.0
    %v439 = vand.u32 %v52, 4294901760
    %440 = vmatpush1.msra.mxu0 %v439
    %441 = vmatprep.subr.mxu0 0.0
    %v442 = vand.u32 %v53, 4294901760
    %443 = vmatpush1.msra.mxu0 %v442
    %444 = vmatprep.subr.mxu0 0.0
    %v445 = vand.u32 %v54, 4294901760
    %446 = vmatpush1.msra.mxu0 %v445
    %447 = vmatprep.subr.mxu0 0.0
    %v448 = vand.u32 %v55, 4294901760
    %449 = vmatpush1.msra.mxu0 %v448
    %450 = vmatprep.subr.mxu0 0.0
    %451 = vmatpush1.msra.mxu0 0.0
    %452 = vmatprep.subr.mxu0 0.0
    %453 = vmatpush1.msra.mxu0 0.0
    %454 = vmatprep.subr.mxu0 0.0
    %455 = vmatpush1.msra.mxu0 0.0
    %456 = vmatprep.subr.mxu0 0.0
    %457 = vmatpush1.msra.mxu0 0.0
    %458 = vmatprep.subr.mxu0 0.0
    %459 = vmatpush1.msra.mxu0 0.0
    %460 = vmatprep.subr.mxu0 0.0
    %461 = vmatpush1.msra.mxu0 0.0
    %462 = vmatprep.subr.mxu0 0.0
    %463 = vmatpush1.msra.mxu0 0.0
    %464 = vmatprep.subr.mxu0 0.0
    %465 = vmatpush1.msra.mxu0 0.0
    %466 = vmatprep.subr.mxu0 0.0
    %467 = vmatpush1.msra.mxu0 0.0
    %468 = vmatprep.subr.mxu0 0.0
    %469 = vmatpush1.msra.mxu0 0.0
    %470 = vmatprep.subr.mxu0 0.0
    %471 = vmatpush1.msra.mxu0 0.0
    %472 = vmatprep.subr.mxu0 0.0
    %473 = vmatpush1.msra.mxu0 0.0
    %474 = vmatprep.subr.mxu0 0.0
    %475 = vmatpush1.msra.mxu0 0.0
    %476 = vmatprep.subr.mxu0 0.0
    %477 = vmatpush1.msra.mxu0 0.0
    %478 = vmatprep.subr.mxu0 0.0
    %479 = vmatpush1.msra.mxu0 0.0
    %480 = vmatprep.subr.mxu0 0.0
    %481 = vmatpush1.msra.mxu0 0.0
    %482 = vmatprep.mubr.f32.mxu0 0.0
    %v483 = vand.u32 %v39, 4294901760
    %v484 = vsub.f32 %v39, %v483
    %v485 = vand.u32 %v484, 4294901760
    %486 = vmatmul.mubr.f32.gmra.mrb[0].mxu0 %v485
    %v487 = vpop.f32.mrb[0].mxu0
    %v488 = vadd.f32 %v399, %v487
    %v489 = vpop.f32.mrb[0].mxu0
    %490 = vdwg.mxu0
    %491 = vmatprep.subr.mxu0 0.0
    %v492 = vand.u32 %v40, 4294901760
    %v493 = vsub.f32 %v40, %v492
    %v494 = vand.u32 %v493, 4294901760
    %495 = vmatpush1.msra.mxu0 %v494
    %496 = vmatprep.subr.mxu0 0.0
    %v497 = vand.u32 %v41, 4294901760
    %v498 = vsub.f32 %v41, %v497
    %v499 = vand.u32 %v498, 4294901760
    %500 = vmatpush1.msra.mxu0 %v499
    %501 = vmatprep.subr.mxu0 0.0
    %v502 = vand.u32 %v42, 4294901760
    %v503 = vsub.f32 %v42, %v502
    %v504 = vand.u32 %v503, 4294901760
    %505 = vmatpush1.msra.mxu0 %v504
    %506 = vmatprep.subr.mxu0 0.0
    %v507 = vand.u32 %v43, 4294901760
    %v508 = vsub.f32 %v43, %v507
    %v509 = vand.u32 %v508, 4294901760
    %510 = vmatpush1.msra.mxu0 %v509
    %511 = vmatprep.subr.mxu0 0.0
    %v512 = vand.u32 %v44, 4294901760
    %v513 = vsub.f32 %v44, %v512
    %v514 = vand.u32 %v513, 4294901760
    %515 = vmatpush1.msra.mxu0 %v514
    %516 = vmatprep.subr.mxu0 0.0
    %v517 = vand.u32 %v45, 4294901760
    %v518 = vsub.f32 %v45, %v517
    %v519 = vand.u32 %v518, 4294901760
    %520 = vmatpush1.msra.mxu0 %v519
    %521 = vmatprep.subr.mxu0 0.0
    %v522 = vand.u32 %v46, 4294901760
    %v523 = vsub.f32 %v46, %v522
    %v524 = vand.u32 %v523, 4294901760
    %525 = vmatpush1.msra.mxu0 %v524
    %526 = vmatprep.subr.mxu0 0.0
    %v527 = vand.u32 %v47, 4294901760
    %v528 = vsub.f32 %v47, %v527
    %v529 = vand.u32 %v528, 4294901760
    %530 = vmatpush1.msra.mxu0 %v529
    %531 = vmatprep.subr.mxu0 0.0
    %v532 = vand.u32 %v48, 4294901760
    %v533 = vsub.f32 %v48, %v532
    %v534 = vand.u32 %v533, 4294901760
    %535 = vmatpush1.msra.mxu0 %v534
    %536 = vmatprep.subr.mxu0 0.0
    %v537 = vand.u32 %v49, 4294901760
    %v538 = vsub.f32 %v49, %v537
    %v539 = vand.u32 %v538, 4294901760
    %540 = vmatpush1.msra.mxu0 %v539
    %541 = vmatprep.subr.mxu0 0.0
    %v542 = vand.u32 %v50, 4294901760
    %v543 = vsub.f32 %v50, %v542
    %v544 = vand.u32 %v543, 4294901760
    %545 = vmatpush1.msra.mxu0 %v544
    %546 = vmatprep.subr.mxu0 0.0
    %v547 = vand.u32 %v51, 4294901760
    %v548 = vsub.f32 %v51, %v547
    %v549 = vand.u32 %v548, 4294901760
    %550 = vmatpush1.msra.mxu0 %v549
    %551 = vmatprep.subr.mxu0 0.0
    %v552 = vand.u32 %v52, 4294901760
    %v553 = vsub.f32 %v52, %v552
    %v554 = vand.u32 %v553, 4294901760
    %555 = vmatpush1.msra.mxu0 %v554
    %556 = vmatprep.subr.mxu0 0.0
    %v557 = vand.u32 %v53, 4294901760
    %v558 = vsub.f32 %v53, %v557
    %v559 = vand.u32 %v558, 4294901760
    %560 = vmatpush1.msra.mxu0 %v559
    %561 = vmatprep.subr.mxu0 0.0
    %v562 = vand.u32 %v54, 4294901760
    %v563 = vsub.f32 %v54, %v562
    %v564 = vand.u32 %v563, 4294901760
    %565 = vmatpush1.msra.mxu0 %v564
    %566 = vmatprep.subr.mxu0 0.0
    %v567 = vand.u32 %v55, 4294901760
    %v568 = vsub.f32 %v55, %v567
    %v569 = vand.u32 %v568, 4294901760
    %570 = vmatpush1.msra.mxu0 %v569
    %571 = vmatprep.subr.mxu0 0.0
    %572 = vmatpush1.msra.mxu0 0.0
    %573 = vmatprep.subr.mxu0 0.0
    %574 = vmatpush1.msra.mxu0 0.0
    %575 = vmatprep.subr.mxu0 0.0
    %576 = vmatpush1.msra.mxu0 0.0
    %577 = vmatprep.subr.mxu0 0.0
    %578 = vmatpush1.msra.mxu0 0.0
    %579 = vmatprep.subr.mxu0 0.0
    %580 = vmatpush1.msra.mxu0 0.0
    %581 = vmatprep.subr.mxu0 0.0
    %582 = vmatpush1.msra.mxu0 0.0
    %583 = vmatprep.subr.mxu0 0.0
    %584 = vmatpush1.msra.mxu0 0.0
    %585 = vmatprep.subr.mxu0 0.0
    %586 = vmatpush1.msra.mxu0 0.0
    %587 = vmatprep.subr.mxu0 0.0
    %588 = vmatpush1.msra.mxu0 0.0
    %589 = vmatprep.subr.mxu0 0.0
    %590 = vmatpush1.msra.mxu0 0.0
    %591 = vmatprep.subr.mxu0 0.0
    %592 = vmatpush1.msra.mxu0 0.0
    %593 = vmatprep.subr.mxu0 0.0
    %594 = vmatpush1.msra.mxu0 0.0
    %595 = vmatprep.subr.mxu0 0.0
    %596 = vmatpush1.msra.mxu0 0.0
    %597 = vmatprep.subr.mxu0 0.0
    %598 = vmatpush1.msra.mxu0 0.0
    %599 = vmatprep.subr.mxu0 0.0
    %600 = vmatpush1.msra.mxu0 0.0
    %601 = vmatprep.subr.mxu0 0.0
    %602 = vmatpush1.msra.mxu0 0.0
    %603 = vmatprep.mubr.f32.mxu0 0.0
    %v604 = vand.u32 %v39, 4294901760
    %605 = vmatmul.mubr.f32.gmra.mrb[0].mxu0 %v604
    %v606 = vpop.f32.mrb[0].mxu0
    %v607 = vadd.f32 %v488, %v606
    %v608 = vpop.f32.mrb[0].mxu0
    %609 = vdwg.mxu0
    %610 = vmatprep.subr.mxu0 0.0
    %v611 = vand.u32 %v40, 4294901760
    %612 = vmatpush1.msra.mxu0 %v611
    %613 = vmatprep.subr.mxu0 0.0
    %v614 = vand.u32 %v41, 4294901760
    %615 = vmatpush1.msra.mxu0 %v614
    %616 = vmatprep.subr.mxu0 0.0
    %v617 = vand.u32 %v42, 4294901760
    %618 = vmatpush1.msra.mxu0 %v617
    %619 = vmatprep.subr.mxu0 0.0
    %v620 = vand.u32 %v43, 4294901760
    %621 = vmatpush1.msra.mxu0 %v620
    %622 = vmatprep.subr.mxu0 0.0
    %v623 = vand.u32 %v44, 4294901760
    %624 = vmatpush1.msra.mxu0 %v623
    %625 = vmatprep.subr.mxu0 0.0
    %v626 = vand.u32 %v45, 4294901760
    %627 = vmatpush1.msra.mxu0 %v626
    %628 = vmatprep.subr.mxu0 0.0
    %v629 = vand.u32 %v46, 4294901760
    %630 = vmatpush1.msra.mxu0 %v629
    %631 = vmatprep.subr.mxu0 0.0
    %v632 = vand.u32 %v47, 4294901760
    %633 = vmatpush1.msra.mxu0 %v632
    %634 = vmatprep.subr.mxu0 0.0
    %v635 = vand.u32 %v48, 4294901760
    %636 = vmatpush1.msra.mxu0 %v635
    %637 = vmatprep.subr.mxu0 0.0
    %v638 = vand.u32 %v49, 4294901760
    %639 = vmatpush1.msra.mxu0 %v638
    %640 = vmatprep.subr.mxu0 0.0
    %v641 = vand.u32 %v50, 4294901760
    %642 = vmatpush1.msra.mxu0 %v641
    %643 = vmatprep.subr.mxu0 0.0
    %v644 = vand.u32 %v51, 4294901760
    %645 = vmatpush1.msra.mxu0 %v644
    %646 = vmatprep.subr.mxu0 0.0
    %v647 = vand.u32 %v52, 4294901760
    %648 = vmatpush1.msra.mxu0 %v647
    %649 = vmatprep.subr.mxu0 0.0
    %v650 = vand.u32 %v53, 4294901760
    %651 = vmatpush1.msra.mxu0 %v650
    %652 = vmatprep.subr.mxu0 0.0
    %v653 = vand.u32 %v54, 4294901760
    %654 = vmatpush1.msra.mxu0 %v653
    %655 = vmatprep.subr.mxu0 0.0
    %v656 = vand.u32 %v55, 4294901760
    %657 = vmatpush1.msra.mxu0 %v656
    %658 = vmatprep.subr.mxu0 0.0
    %659 = vmatpush1.msra.mxu0 0.0
    %660 = vmatprep.subr.mxu0 0.0
    %661 = vmatpush1.msra.mxu0 0.0
    %662 = vmatprep.subr.mxu0 0.0
    %663 = vmatpush1.msra.mxu0 0.0
    %664 = vmatprep.subr.mxu0 0.0
    %665 = vmatpush1.msra.mxu0 0.0
    %666 = vmatprep.subr.mxu0 0.0
    %667 = vmatpush1.msra.mxu0 0.0
    %668 = vmatprep.subr.mxu0 0.0
    %669 = vmatpush1.msra.mxu0 0.0
    %670 = vmatprep.subr.mxu0 0.0
    %671 = vmatpush1.msra.mxu0 0.0
    %672 = vmatprep.subr.mxu0 0.0
    %673 = vmatpush1.msra.mxu0 0.0
    %674 = vmatprep.subr.mxu0 0.0
    %675 = vmatpush1.msra.mxu0 0.0
    %676 = vmatprep.subr.mxu0 0.0
    %677 = vmatpush1.msra.mxu0 0.0
    %678 = vmatprep.subr.mxu0 0.0
    %679 = vmatpush1.msra.mxu0 0.0
    %680 = vmatprep.subr.mxu0 0.0
    %681 = vmatpush1.msra.mxu0 0.0
    %682 = vmatprep.subr.mxu0 0.0
    %683 = vmatpush1.msra.mxu0 0.0
    %684 = vmatprep.subr.mxu0 0.0
    %685 = vmatpush1.msra.mxu0 0.0
    %686 = vmatprep.subr.mxu0 0.0
    %687 = vmatpush1.msra.mxu0 0.0
    %688 = vmatprep.subr.mxu0 0.0
    %689 = vmatpush1.msra.mxu0 0.0
    %690 = vmatprep.mubr.f32.mxu0 0.0
    %v691 = vand.u32 %v39, 4294901760
    %692 = vmatmul.mubr.f32.gmra.mrb[0].mxu0 %v691
    %v693 = vpop.f32.mrb[0].mxu0
    %v694 = vadd.f32 %v607, %v693
    %v695 = vpop.f32.mrb[0].mxu0
    %696 = vdwg.mxu0
    %697 = vmatprep.subr.mxu0 0.0
    %v698 = vand.u32 %v23, 4294901760
    %699 = vmatpush1.msra.mxu0 %v698
    %700 = vmatprep.subr.mxu0 0.0
    %v701 = vand.u32 %v24, 4294901760
    %702 = vmatpush1.msra.mxu0 %v701
    %703 = vmatprep.subr.mxu0 0.0
    %v704 = vand.u32 %v25, 4294901760
    %705 = vmatpush1.msra.mxu0 %v704
    %706 = vmatprep.subr.mxu0 0.0
    %v707 = vand.u32 %v26, 4294901760
    %708 = vmatpush1.msra.mxu0 %v707
    %709 = vmatprep.subr.mxu0 0.0
    %v710 = vand.u32 %v27, 4294901760
    %711 = vmatpush1.msra.mxu0 %v710
    %712 = vmatprep.subr.mxu0 0.0
    %v713 = vand.u32 %v28, 4294901760
    %714 = vmatpush1.msra.mxu0 %v713
    %715 = vmatprep.subr.mxu0 0.0
    %v716 = vand.u32 %v29, 4294901760
    %717 = vmatpush1.msra.mxu0 %v716
    %718 = vmatprep.subr.mxu0 0.0
    %v719 = vand.u32 %v30, 4294901760
    %720 = vmatpush1.msra.mxu0 %v719
    %721 = vmatprep.subr.mxu0 0.0
    %v722 = vand.u32 %v31, 4294901760
    %723 = vmatpush1.msra.mxu0 %v722
    %724 = vmatprep.subr.mxu0 0.0
    %v725 = vand.u32 %v32, 4294901760
    %726 = vmatpush1.msra.mxu0 %v725
    %727 = vmatprep.subr.mxu0 0.0
    %v728 = vand.u32 %v33, 4294901760
    %729 = vmatpush1.msra.mxu0 %v728
    %730 = vmatprep.subr.mxu0 0.0
    %v731 = vand.u32 %v34, 4294901760
    %732 = vmatpush1.msra.mxu0 %v731
    %733 = vmatprep.subr.mxu0 0.0
    %v734 = vand.u32 %v35, 4294901760
    %735 = vmatpush1.msra.mxu0 %v734
    %736 = vmatprep.subr.mxu0 0.0
    %v737 = vand.u32 %v36, 4294901760
    %738 = vmatpush1.msra.mxu0 %v737
    %739 = vmatprep.subr.mxu0 0.0
    %v740 = vand.u32 %v37, 4294901760
    %741 = vmatpush1.msra.mxu0 %v740
    %742 = vmatprep.subr.mxu0 0.0
    %v743 = vand.u32 %v38, 4294901760
    %744 = vmatpush1.msra.mxu0 %v743
    %745 = vmatprep.subr.mxu0 0.0
    %746 = vmatpush1.msra.mxu0 0.0
    %747 = vmatprep.subr.mxu0 0.0
    %748 = vmatpush1.msra.mxu0 0.0
    %749 = vmatprep.subr.mxu0 0.0
    %750 = vmatpush1.msra.mxu0 0.0
    %751 = vmatprep.subr.mxu0 0.0
    %752 = vmatpush1.msra.mxu0 0.0
    %753 = vmatprep.subr.mxu0 0.0
    %754 = vmatpush1.msra.mxu0 0.0
    %755 = vmatprep.subr.mxu0 0.0
    %756 = vmatpush1.msra.mxu0 0.0
    %757 = vmatprep.subr.mxu0 0.0
    %758 = vmatpush1.msra.mxu0 0.0
    %759 = vmatprep.subr.mxu0 0.0
    %760 = vmatpush1.msra.mxu0 0.0
    %761 = vmatprep.subr.mxu0 0.0
    %762 = vmatpush1.msra.mxu0 0.0
    %763 = vmatprep.subr.mxu0 0.0
    %764 = vmatpush1.msra.mxu0 0.0
    %765 = vmatprep.subr.mxu0 0.0
    %766 = vmatpush1.msra.mxu0 0.0
    %767 = vmatprep.subr.mxu0 0.0
    %768 = vmatpush1.msra.mxu0 0.0
    %769 = vmatprep.subr.mxu0 0.0
    %770 = vmatpush1.msra.mxu0 0.0
    %771 = vmatprep.subr.mxu0 0.0
    %772 = vmatpush1.msra.mxu0 0.0
    %773 = vmatprep.subr.mxu0 0.0
    %774 = vmatpush1.msra.mxu0 0.0
    %775 = vmatprep.subr.mxu0 0.0
    %776 = vmatpush1.msra.mxu0 0.0
    %777 = vmatprep.mubr.f32.mxu0 0.0
    %v778 = vand.u32 %v22, 4294901760
    %v779 = vsub.f32 %v22, %v778
    %v780 = vand.u32 %v779, 4294901760
    %v781 = vsub.f32 %v779, %v780
    %v782 = vand.u32 %v781, 4294901760
    %783 = vmatmul.mubr.f32.gmra.mrb[0].mxu0 %v782
    %v784 = vpop.f32.mrb[0].mxu0
    %v785 = vadd.f32 %v694, %v784
    %v786 = vpop.f32.mrb[0].mxu0
    %787 = vdwg.mxu0
    %788 = vmatprep.subr.mxu0 0.0
    %v789 = vand.u32 %v23, 4294901760
    %v790 = vsub.f32 %v23, %v789
    %v791 = vand.u32 %v790, 4294901760
    %v792 = vsub.f32 %v790, %v791
    %v793 = vand.u32 %v792, 4294901760
    %794 = vmatpush1.msra.mxu0 %v793
    %795 = vmatprep.subr.mxu0 0.0
    %v796 = vand.u32 %v24, 4294901760
    %v797 = vsub.f32 %v24, %v796
    %v798 = vand.u32 %v797, 4294901760
    %v799 = vsub.f32 %v797, %v798
    %v800 = vand.u32 %v799, 4294901760
    %801 = vmatpush1.msra.mxu0 %v800
    %802 = vmatprep.subr.mxu0 0.0
    %v803 = vand.u32 %v25, 4294901760
    %v804 = vsub.f32 %v25, %v803
    %v805 = vand.u32 %v804, 4294901760
    %v806 = vsub.f32 %v804, %v805
    %v807 = vand.u32 %v806, 4294901760
    %808 = vmatpush1.msra.mxu0 %v807
    %809 = vmatprep.subr.mxu0 0.0
    %v810 = vand.u32 %v26, 4294901760
    %v811 = vsub.f32 %v26, %v810
    %v812 = vand.u32 %v811, 4294901760
    %v813 = vsub.f32 %v811, %v812
    %v814 = vand.u32 %v813, 4294901760
    %815 = vmatpush1.msra.mxu0 %v814
    %816 = vmatprep.subr.mxu0 0.0
    %v817 = vand.u32 %v27, 4294901760
    %v818 = vsub.f32 %v27, %v817
    %v819 = vand.u32 %v818, 4294901760
    %v820 = vsub.f32 %v818, %v819
    %v821 = vand.u32 %v820, 4294901760
    %822 = vmatpush1.msra.mxu0 %v821
    %823 = vmatprep.subr.mxu0 0.0
    %v824 = vand.u32 %v28, 4294901760
    %v825 = vsub.f32 %v28, %v824
    %v826 = vand.u32 %v825, 4294901760
    %v827 = vsub.f32 %v825, %v826
    %v828 = vand.u32 %v827, 4294901760
    %829 = vmatpush1.msra.mxu0 %v828
    %830 = vmatprep.subr.mxu0 0.0
    %v831 = vand.u32 %v29, 4294901760
    %v832 = vsub.f32 %v29, %v831
    %v833 = vand.u32 %v832, 4294901760
    %v834 = vsub.f32 %v832, %v833
    %v835 = vand.u32 %v834, 4294901760
    %836 = vmatpush1.msra.mxu0 %v835
    %837 = vmatprep.subr.mxu0 0.0
    %v838 = vand.u32 %v30, 4294901760
    %v839 = vsub.f32 %v30, %v838
    %v840 = vand.u32 %v839, 4294901760
    %v841 = vsub.f32 %v839, %v840
    %v842 = vand.u32 %v841, 4294901760
    %843 = vmatpush1.msra.mxu0 %v842
    %844 = vmatprep.subr.mxu0 0.0
    %v845 = vand.u32 %v31, 4294901760
    %v846 = vsub.f32 %v31, %v845
    %v847 = vand.u32 %v846, 4294901760
    %v848 = vsub.f32 %v846, %v847
    %v849 = vand.u32 %v848, 4294901760
    %850 = vmatpush1.msra.mxu0 %v849
    %851 = vmatprep.subr.mxu0 0.0
    %v852 = vand.u32 %v32, 4294901760
    %v853 = vsub.f32 %v32, %v852
    %v854 = vand.u32 %v853, 4294901760
    %v855 = vsub.f32 %v853, %v854
    %v856 = vand.u32 %v855, 4294901760
    %857 = vmatpush1.msra.mxu0 %v856
    %858 = vmatprep.subr.mxu0 0.0
    %v859 = vand.u32 %v33, 4294901760
    %v860 = vsub.f32 %v33, %v859
    %v861 = vand.u32 %v860, 4294901760
    %v862 = vsub.f32 %v860, %v861
    %v863 = vand.u32 %v862, 4294901760
    %864 = vmatpush1.msra.mxu0 %v863
    %865 = vmatprep.subr.mxu0 0.0
    %v866 = vand.u32 %v34, 4294901760
    %v867 = vsub.f32 %v34, %v866
    %v868 = vand.u32 %v867, 4294901760
    %v869 = vsub.f32 %v867, %v868
    %v870 = vand.u32 %v869, 4294901760
    %871 = vmatpush1.msra.mxu0 %v870
    %872 = vmatprep.subr.mxu0 0.0
    %v873 = vand.u32 %v35, 4294901760
    %v874 = vsub.f32 %v35, %v873
    %v875 = vand.u32 %v874, 4294901760
    %v876 = vsub.f32 %v874, %v875
    %v877 = vand.u32 %v876, 4294901760
    %878 = vmatpush1.msra.mxu0 %v877
    %879 = vmatprep.subr.mxu0 0.0
    %v880 = vand.u32 %v36, 4294901760
    %v881 = vsub.f32 %v36, %v880
    %v882 = vand.u32 %v881, 4294901760
    %v883 = vsub.f32 %v881, %v882
    %v884 = vand.u32 %v883, 4294901760
    %885 = vmatpush1.msra.mxu0 %v884
    %886 = vmatprep.subr.mxu0 0.0
    %v887 = vand.u32 %v37, 4294901760
    %v888 = vsub.f32 %v37, %v887
    %v889 = vand.u32 %v888, 4294901760
    %v890 = vsub.f32 %v888, %v889
    %v891 = vand.u32 %v890, 4294901760
    %892 = vmatpush1.msra.mxu0 %v891
    %893 = vmatprep.subr.mxu0 0.0
    %v894 = vand.u32 %v38, 4294901760
    %v895 = vsub.f32 %v38, %v894
    %v896 = vand.u32 %v895, 4294901760
    %v897 = vsub.f32 %v895, %v896
    %v898 = vand.u32 %v897, 4294901760
    %899 = vmatpush1.msra.mxu0 %v898
    %900 = vmatprep.subr.mxu0 0.0
    %901 = vmatpush1.msra.mxu0 0.0
    %902 = vmatprep.subr.mxu0 0.0
    %903 = vmatpush1.msra.mxu0 0.0
    %904 = vmatprep.subr.mxu0 0.0
    %905 = vmatpush1.msra.mxu0 0.0
    %906 = vmatprep.subr.mxu0 0.0
    %907 = vmatpush1.msra.mxu0 0.0
    %908 = vmatprep.subr.mxu0 0.0
    %909 = vmatpush1.msra.mxu0 0.0
    %910 = vmatprep.subr.mxu0 0.0
    %911 = vmatpush1.msra.mxu0 0.0
    %912 = vmatprep.subr.mxu0 0.0
    %913 = vmatpush1.msra.mxu0 0.0
    %914 = vmatprep.subr.mxu0 0.0
    %915 = vmatpush1.msra.mxu0 0.0
    %916 = vmatprep.subr.mxu0 0.0
    %917 = vmatpush1.msra.mxu0 0.0
    %918 = vmatprep.subr.mxu0 0.0
    %919 = vmatpush1.msra.mxu0 0.0
    %920 = vmatprep.subr.mxu0 0.0
    %921 = vmatpush1.msra.mxu0 0.0
    %922 = vmatprep.subr.mxu0 0.0
    %923 = vmatpush1.msra.mxu0 0.0
    %924 = vmatprep.subr.mxu0 0.0
    %925 = vmatpush1.msra.mxu0 0.0
    %926 = vmatprep.subr.mxu0 0.0
    %927 = vmatpush1.msra.mxu0 0.0
    %928 = vmatprep.subr.mxu0 0.0
    %929 = vmatpush1.msra.mxu0 0.0
    %930 = vmatprep.subr.mxu0 0.0
    %931 = vmatpush1.msra.mxu0 0.0
    %932 = vmatprep.mubr.f32.mxu0 0.0
    %v933 = vand.u32 %v22, 4294901760
    %934 = vmatmul.mubr.f32.gmra.mrb[0].mxu0 %v933
    %v935 = vpop.f32.mrb[0].mxu0
    %v936 = vadd.f32 %v785, %v935
    %v937 = vpop.f32.mrb[0].mxu0
    %938 = vdwg.mxu0
    %939 = vmatprep.subr.mxu0 0.0
    %v940 = vand.u32 %v23, 4294901760
    %v941 = vsub.f32 %v23, %v940
    %942 = vmatpush1.msra.mxu0 %v941
    %943 = vmatprep.subr.mxu0 0.0
    %v944 = vand.u32 %v24, 4294901760
    %v945 = vsub.f32 %v24, %v944
    %946 = vmatpush1.msra.mxu0 %v945
    %947 = vmatprep.subr.mxu0 0.0
    %v948 = vand.u32 %v25, 4294901760
    %v949 = vsub.f32 %v25, %v948
    %950 = vmatpush1.msra.mxu0 %v949
    %951 = vmatprep.subr.mxu0 0.0
    %v952 = vand.u32 %v26, 4294901760
    %v953 = vsub.f32 %v26, %v952
    %954 = vmatpush1.msra.mxu0 %v953
    %955 = vmatprep.subr.mxu0 0.0
    %v956 = vand.u32 %v27, 4294901760
    %v957 = vsub.f32 %v27, %v956
    %958 = vmatpush1.msra.mxu0 %v957
    %959 = vmatprep.subr.mxu0 0.0
    %v960 = vand.u32 %v28, 4294901760
    %v961 = vsub.f32 %v28, %v960
    %962 = vmatpush1.msra.mxu0 %v961
    %963 = vmatprep.subr.mxu0 0.0
    %v964 = vand.u32 %v29, 4294901760
    %v965 = vsub.f32 %v29, %v964
    %966 = vmatpush1.msra.mxu0 %v965
    %967 = vmatprep.subr.mxu0 0.0
    %v968 = vand.u32 %v30, 4294901760
    %v969 = vsub.f32 %v30, %v968
    %970 = vmatpush1.msra.mxu0 %v969
    %971 = vmatprep.subr.mxu0 0.0
    %v972 = vand.u32 %v31, 4294901760
    %v973 = vsub.f32 %v31, %v972
    %974 = vmatpush1.msra.mxu0 %v973
    %975 = vmatprep.subr.mxu0 0.0
    %v976 = vand.u32 %v32, 4294901760
    %v977 = vsub.f32 %v32, %v976
    %978 = vmatpush1.msra.mxu0 %v977
    %979 = vmatprep.subr.mxu0 0.0
    %v980 = vand.u32 %v33, 4294901760
    %v981 = vsub.f32 %v33, %v980
    %982 = vmatpush1.msra.mxu0 %v981
    %983 = vmatprep.subr.mxu0 0.0
    %v984 = vand.u32 %v34, 4294901760
    %v985 = vsub.f32 %v34, %v984
    %986 = vmatpush1.msra.mxu0 %v985
    %987 = vmatprep.subr.mxu0 0.0
    %v988 = vand.u32 %v35, 4294901760
    %v989 = vsub.f32 %v35, %v988
    %990 = vmatpush1.msra.mxu0 %v989
    %991 = vmatprep.subr.mxu0 0.0
    %v992 = vand.u32 %v36, 4294901760
    %v993 = vsub.f32 %v36, %v992
    %994 = vmatpush1.msra.mxu0 %v993
    %995 = vmatprep.subr.mxu0 0.0
    %v996 = vand.u32 %v37, 4294901760
    %v997 = vsub.f32 %v37, %v996
    %998 = vmatpush1.msra.mxu0 %v997
    %999 = vmatprep.subr.mxu0 0.0
    %v1000 = vand.u32 %v38, 4294901760
    %v1001 = vsub.f32 %v38, %v1000
    %1002 = vmatpush1.msra.mxu0 %v1001
    %1003 = vmatprep.subr.mxu0 0.0
    %1004 = vmatpush1.msra.mxu0 0.0
    %1005 = vmatprep.subr.mxu0 0.0
    %1006 = vmatpush1.msra.mxu0 0.0
    %1007 = vmatprep.subr.mxu0 0.0
    %1008 = vmatpush1.msra.mxu0 0.0
    %1009 = vmatprep.subr.mxu0 0.0
    %1010 = vmatpush1.msra.mxu0 0.0
    %1011 = vmatprep.subr.mxu0 0.0
    %1012 = vmatpush1.msra.mxu0 0.0
    %1013 = vmatprep.subr.mxu0 0.0
    %1014 = vmatpush1.msra.mxu0 0.0
    %1015 = vmatprep.subr.mxu0 0.0
    %1016 = vmatpush1.msra.mxu0 0.0
    %1017 = vmatprep.subr.mxu0 0.0
    %1018 = vmatpush1.msra.mxu0 0.0
    %1019 = vmatprep.subr.mxu0 0.0
    %1020 = vmatpush1.msra.mxu0 0.0
    %1021 = vmatprep.subr.mxu0 0.0
    %1022 = vmatpush1.msra.mxu0 0.0
    %1023 = vmatprep.subr.mxu0 0.0
    %1024 = vmatpush1.msra.mxu0 0.0
    %1025 = vmatprep.subr.mxu0 0.0
    %1026 = vmatpush1.msra.mxu0 0.0
    %1027 = vmatprep.subr.mxu0 0.0
    %1028 = vmatpush1.msra.mxu0 0.0
    %1029 = vmatprep.subr.mxu0 0.0
    %1030 = vmatpush1.msra.mxu0 0.0
    %1031 = vmatprep.subr.mxu0 0.0
    %1032 = vmatpush1.msra.mxu0 0.0
    %1033 = vmatprep.subr.mxu0 0.0
    %1034 = vmatpush1.msra.mxu0 0.0
    %1035 = vmatprep.mubr.f32.mxu0 0.0
    %v1036 = vand.u32 %v22, 4294901760
    %v1037 = vsub.f32 %v22, %v1036
    %1038 = vmatmul.mubr.f32.gmra.mrb[0].mxu0 %v1037
    %v1039 = vpop.f32.mrb[0].mxu0
    %v1040 = vadd.f32 %v936, %v1039
    %v1041 = vpop.f32.mrb[0].mxu0
    %1042 = vdwg.mxu0
    %1043 = vmatprep.subr.mxu0 0.0
    %v1044 = vand.u32 %v23, 4294901760
    %1045 = vmatpush1.msra.mxu0 %v1044
    %1046 = vmatprep.subr.mxu0 0.0
    %v1047 = vand.u32 %v24, 4294901760
    %1048 = vmatpush1.msra.mxu0 %v1047
    %1049 = vmatprep.subr.mxu0 0.0
    %v1050 = vand.u32 %v25, 4294901760
    %1051 = vmatpush1.msra.mxu0 %v1050
    %1052 = vmatprep.subr.mxu0 0.0
    %v1053 = vand.u32 %v26, 4294901760
    %1054 = vmatpush1.msra.mxu0 %v1053
    %1055 = vmatprep.subr.mxu0 0.0
    %v1056 = vand.u32 %v27, 4294901760
    %1057 = vmatpush1.msra.mxu0 %v1056
    %1058 = vmatprep.subr.mxu0 0.0
    %v1059 = vand.u32 %v28, 4294901760
    %1060 = vmatpush1.msra.mxu0 %v1059
    %1061 = vmatprep.subr.mxu0 0.0
    %v1062 = vand.u32 %v29, 4294901760
    %1063 = vmatpush1.msra.mxu0 %v1062
    %1064 = vmatprep.subr.mxu0 0.0
    %v1065 = vand.u32 %v30, 4294901760
    %1066 = vmatpush1.msra.mxu0 %v1065
    %1067 = vmatprep.subr.mxu0 0.0
    %v1068 = vand.u32 %v31, 4294901760
    %1069 = vmatpush1.msra.mxu0 %v1068
    %1070 = vmatprep.subr.mxu0 0.0
    %v1071 = vand.u32 %v32, 4294901760
    %1072 = vmatpush1.msra.mxu0 %v1071
    %1073 = vmatprep.subr.mxu0 0.0
    %v1074 = vand.u32 %v33, 4294901760
    %1075 = vmatpush1.msra.mxu0 %v1074
    %1076 = vmatprep.subr.mxu0 0.0
    %v1077 = vand.u32 %v34, 4294901760
    %1078 = vmatpush1.msra.mxu0 %v1077
    %1079 = vmatprep.subr.mxu0 0.0
    %v1080 = vand.u32 %v35, 4294901760
    %1081 = vmatpush1.msra.mxu0 %v1080
    %1082 = vmatprep.subr.mxu0 0.0
    %v1083 = vand.u32 %v36, 4294901760
    %1084 = vmatpush1.msra.mxu0 %v1083
    %1085 = vmatprep.subr.mxu0 0.0
    %v1086 = vand.u32 %v37, 4294901760
    %1087 = vmatpush1.msra.mxu0 %v1086
    %1088 = vmatprep.subr.mxu0 0.0
    %v1089 = vand.u32 %v38, 4294901760
    %1090 = vmatpush1.msra.mxu0 %v1089
    %1091 = vmatprep.subr.mxu0 0.0
    %1092 = vmatpush1.msra.mxu0 0.0
    %1093 = vmatprep.subr.mxu0 0.0
    %1094 = vmatpush1.msra.mxu0 0.0
    %1095 = vmatprep.subr.mxu0 0.0
    %1096 = vmatpush1.msra.mxu0 0.0
    %1097 = vmatprep.subr.mxu0 0.0
    %1098 = vmatpush1.msra.mxu0 0.0
    %1099 = vmatprep.subr.mxu0 0.0
    %1100 = vmatpush1.msra.mxu0 0.0
    %1101 = vmatprep.subr.mxu0 0.0
    %1102 = vmatpush1.msra.mxu0 0.0
    %1103 = vmatprep.subr.mxu0 0.0
    %1104 = vmatpush1.msra.mxu0 0.0
    %1105 = vmatprep.subr.mxu0 0.0
    %1106 = vmatpush1.msra.mxu0 0.0
    %1107 = vmatprep.subr.mxu0 0.0
    %1108 = vmatpush1.msra.mxu0 0.0
    %1109 = vmatprep.subr.mxu0 0.0
    %1110 = vmatpush1.msra.mxu0 0.0
    %1111 = vmatprep.subr.mxu0 0.0
    %1112 = vmatpush1.msra.mxu0 0.0
    %1113 = vmatprep.subr.mxu0 0.0
    %1114 = vmatpush1.msra.mxu0 0.0
    %1115 = vmatprep.subr.mxu0 0.0
    %1116 = vmatpush1.msra.mxu0 0.0
    %1117 = vmatprep.subr.mxu0 0.0
    %1118 = vmatpush1.msra.mxu0 0.0
    %1119 = vmatprep.subr.mxu0 0.0
    %1120 = vmatpush1.msra.mxu0 0.0
    %1121 = vmatprep.subr.mxu0 0.0
    %1122 = vmatpush1.msra.mxu0 0.0
    %1123 = vmatprep.mubr.f32.mxu0 0.0
    %v1124 = vand.u32 %v22, 4294901760
    %v1125 = vsub.f32 %v22, %v1124
    %v1126 = vand.u32 %v1125, 4294901760
    %1127 = vmatmul.mubr.f32.gmra.mrb[0].mxu0 %v1126
    %v1128 = vpop.f32.mrb[0].mxu0
    %v1129 = vadd.f32 %v1040, %v1128
    %v1130 = vpop.f32.mrb[0].mxu0
    %1131 = vdwg.mxu0
    %1132 = vmatprep.subr.mxu0 0.0
    %v1133 = vand.u32 %v23, 4294901760
    %v1134 = vsub.f32 %v23, %v1133
    %v1135 = vand.u32 %v1134, 4294901760
    %1136 = vmatpush1.msra.mxu0 %v1135
    %1137 = vmatprep.subr.mxu0 0.0
    %v1138 = vand.u32 %v24, 4294901760
    %v1139 = vsub.f32 %v24, %v1138
    %v1140 = vand.u32 %v1139, 4294901760
    %1141 = vmatpush1.msra.mxu0 %v1140
    %1142 = vmatprep.subr.mxu0 0.0
    %v1143 = vand.u32 %v25, 4294901760
    %v1144 = vsub.f32 %v25, %v1143
    %v1145 = vand.u32 %v1144, 4294901760
    %1146 = vmatpush1.msra.mxu0 %v1145
    %1147 = vmatprep.subr.mxu0 0.0
    %v1148 = vand.u32 %v26, 4294901760
    %v1149 = vsub.f32 %v26, %v1148
    %v1150 = vand.u32 %v1149, 4294901760
    %1151 = vmatpush1.msra.mxu0 %v1150
    %1152 = vmatprep.subr.mxu0 0.0
    %v1153 = vand.u32 %v27, 4294901760
    %v1154 = vsub.f32 %v27, %v1153
    %v1155 = vand.u32 %v1154, 4294901760
    %1156 = vmatpush1.msra.mxu0 %v1155
    %1157 = vmatprep.subr.mxu0 0.0
    %v1158 = vand.u32 %v28, 4294901760
    %v1159 = vsub.f32 %v28, %v1158
    %v1160 = vand.u32 %v1159, 4294901760
    %1161 = vmatpush1.msra.mxu0 %v1160
    %1162 = vmatprep.subr.mxu0 0.0
    %v1163 = vand.u32 %v29, 4294901760
    %v1164 = vsub.f32 %v29, %v1163
    %v1165 = vand.u32 %v1164, 4294901760
    %1166 = vmatpush1.msra.mxu0 %v1165
    %1167 = vmatprep.subr.mxu0 0.0
    %v1168 = vand.u32 %v30, 4294901760
    %v1169 = vsub.f32 %v30, %v1168
    %v1170 = vand.u32 %v1169, 4294901760
    %1171 = vmatpush1.msra.mxu0 %v1170
    %1172 = vmatprep.subr.mxu0 0.0
    %v1173 = vand.u32 %v31, 4294901760
    %v1174 = vsub.f32 %v31, %v1173
    %v1175 = vand.u32 %v1174, 4294901760
    %1176 = vmatpush1.msra.mxu0 %v1175
    %1177 = vmatprep.subr.mxu0 0.0
    %v1178 = vand.u32 %v32, 4294901760
    %v1179 = vsub.f32 %v32, %v1178
    %v1180 = vand.u32 %v1179, 4294901760
    %1181 = vmatpush1.msra.mxu0 %v1180
    %1182 = vmatprep.subr.mxu0 0.0
    %v1183 = vand.u32 %v33, 4294901760
    %v1184 = vsub.f32 %v33, %v1183
    %v1185 = vand.u32 %v1184, 4294901760
    %1186 = vmatpush1.msra.mxu0 %v1185
    %1187 = vmatprep.subr.mxu0 0.0
    %v1188 = vand.u32 %v34, 4294901760
    %v1189 = vsub.f32 %v34, %v1188
    %v1190 = vand.u32 %v1189, 4294901760
    %1191 = vmatpush1.msra.mxu0 %v1190
    %1192 = vmatprep.subr.mxu0 0.0
    %v1193 = vand.u32 %v35, 4294901760
    %v1194 = vsub.f32 %v35, %v1193
    %v1195 = vand.u32 %v1194, 4294901760
    %1196 = vmatpush1.msra.mxu0 %v1195
    %1197 = vmatprep.subr.mxu0 0.0
    %v1198 = vand.u32 %v36, 4294901760
    %v1199 = vsub.f32 %v36, %v1198
    %v1200 = vand.u32 %v1199, 4294901760
    %1201 = vmatpush1.msra.mxu0 %v1200
    %1202 = vmatprep.subr.mxu0 0.0
    %v1203 = vand.u32 %v37, 4294901760
    %v1204 = vsub.f32 %v37, %v1203
    %v1205 = vand.u32 %v1204, 4294901760
    %1206 = vmatpush1.msra.mxu0 %v1205
    %1207 = vmatprep.subr.mxu0 0.0
    %v1208 = vand.u32 %v38, 4294901760
    %v1209 = vsub.f32 %v38, %v1208
    %v1210 = vand.u32 %v1209, 4294901760
    %1211 = vmatpush1.msra.mxu0 %v1210
    %1212 = vmatprep.subr.mxu0 0.0
    %1213 = vmatpush1.msra.mxu0 0.0
    %1214 = vmatprep.subr.mxu0 0.0
    %1215 = vmatpush1.msra.mxu0 0.0
    %1216 = vmatprep.subr.mxu0 0.0
    %1217 = vmatpush1.msra.mxu0 0.0
    %1218 = vmatprep.subr.mxu0 0.0
    %1219 = vmatpush1.msra.mxu0 0.0
    %1220 = vmatprep.subr.mxu0 0.0
    %1221 = vmatpush1.msra.mxu0 0.0
    %1222 = vmatprep.subr.mxu0 0.0
    %1223 = vmatpush1.msra.mxu0 0.0
    %1224 = vmatprep.subr.mxu0 0.0
    %1225 = vmatpush1.msra.mxu0 0.0
    %1226 = vmatprep.subr.mxu0 0.0
    %1227 = vmatpush1.msra.mxu0 0.0
    %1228 = vmatprep.subr.mxu0 0.0
    %1229 = vmatpush1.msra.mxu0 0.0
    %1230 = vmatprep.subr.mxu0 0.0
    %1231 = vmatpush1.msra.mxu0 0.0
    %1232 = vmatprep.subr.mxu0 0.0
    %1233 = vmatpush1.msra.mxu0 0.0
    %1234 = vmatprep.subr.mxu0 0.0
    %1235 = vmatpush1.msra.mxu0 0.0
    %1236 = vmatprep.subr.mxu0 0.0
    %1237 = vmatpush1.msra.mxu0 0.0
    %1238 = vmatprep.subr.mxu0 0.0
    %1239 = vmatpush1.msra.mxu0 0.0
    %1240 = vmatprep.subr.mxu0 0.0
    %1241 = vmatpush1.msra.mxu0 0.0
    %1242 = vmatprep.subr.mxu0 0.0
    %1243 = vmatpush1.msra.mxu0 0.0
    %1244 = vmatprep.mubr.f32.mxu0 0.0
    %v1245 = vand.u32 %v22, 4294901760
    %1246 = vmatmul.mubr.f32.gmra.mrb[0].mxu0 %v1245
    %v1247 = vpop.f32.mrb[0].mxu0
    %v1248 = vadd.f32 %v1129, %v1247
    %v1249 = vpop.f32.mrb[0].mxu0
    %1250 = vdwg.mxu0
    %1251 = vmatprep.subr.mxu0 0.0
    %v1252 = vand.u32 %v23, 4294901760
    %1253 = vmatpush1.msra.mxu0 %v1252
    %1254 = vmatprep.subr.mxu0 0.0
    %v1255 = vand.u32 %v24, 4294901760
    %1256 = vmatpush1.msra.mxu0 %v1255
    %1257 = vmatprep.subr.mxu0 0.0
    %v1258 = vand.u32 %v25, 4294901760
    %1259 = vmatpush1.msra.mxu0 %v1258
    %1260 = vmatprep.subr.mxu0 0.0
    %v1261 = vand.u32 %v26, 4294901760
    %1262 = vmatpush1.msra.mxu0 %v1261
    %1263 = vmatprep.subr.mxu0 0.0
    %v1264 = vand.u32 %v27, 4294901760
    %1265 = vmatpush1.msra.mxu0 %v1264
    %1266 = vmatprep.subr.mxu0 0.0
    %v1267 = vand.u32 %v28, 4294901760
    %1268 = vmatpush1.msra.mxu0 %v1267
    %1269 = vmatprep.subr.mxu0 0.0
    %v1270 = vand.u32 %v29, 4294901760
    %1271 = vmatpush1.msra.mxu0 %v1270
    %1272 = vmatprep.subr.mxu0 0.0
    %v1273 = vand.u32 %v30, 4294901760
    %1274 = vmatpush1.msra.mxu0 %v1273
    %1275 = vmatprep.subr.mxu0 0.0
    %v1276 = vand.u32 %v31, 4294901760
    %1277 = vmatpush1.msra.mxu0 %v1276
    %1278 = vmatprep.subr.mxu0 0.0
    %v1279 = vand.u32 %v32, 4294901760
    %1280 = vmatpush1.msra.mxu0 %v1279
    %1281 = vmatprep.subr.mxu0 0.0
    %v1282 = vand.u32 %v33, 4294901760
    %1283 = vmatpush1.msra.mxu0 %v1282
    %1284 = vmatprep.subr.mxu0 0.0
    %v1285 = vand.u32 %v34, 4294901760
    %1286 = vmatpush1.msra.mxu0 %v1285
    %1287 = vmatprep.subr.mxu0 0.0
    %v1288 = vand.u32 %v35, 4294901760
    %1289 = vmatpush1.msra.mxu0 %v1288
    %1290 = vmatprep.subr.mxu0 0.0
    %v1291 = vand.u32 %v36, 4294901760
    %1292 = vmatpush1.msra.mxu0 %v1291
    %1293 = vmatprep.subr.mxu0 0.0
    %v1294 = vand.u32 %v37, 4294901760
    %1295 = vmatpush1.msra.mxu0 %v1294
    %1296 = vmatprep.subr.mxu0 0.0
    %v1297 = vand.u32 %v38, 4294901760
    %1298 = vmatpush1.msra.mxu0 %v1297
    %1299 = vmatprep.subr.mxu0 0.0
    %1300 = vmatpush1.msra.mxu0 0.0
    %1301 = vmatprep.subr.mxu0 0.0
    %1302 = vmatpush1.msra.mxu0 0.0
    %1303 = vmatprep.subr.mxu0 0.0
    %1304 = vmatpush1.msra.mxu0 0.0
    %1305 = vmatprep.subr.mxu0 0.0
    %1306 = vmatpush1.msra.mxu0 0.0
    %1307 = vmatprep.subr.mxu0 0.0
    %1308 = vmatpush1.msra.mxu0 0.0
    %1309 = vmatprep.subr.mxu0 0.0
    %1310 = vmatpush1.msra.mxu0 0.0
    %1311 = vmatprep.subr.mxu0 0.0
    %1312 = vmatpush1.msra.mxu0 0.0
    %1313 = vmatprep.subr.mxu0 0.0
    %1314 = vmatpush1.msra.mxu0 0.0
    %1315 = vmatprep.subr.mxu0 0.0
    %1316 = vmatpush1.msra.mxu0 0.0
    %1317 = vmatprep.subr.mxu0 0.0
    %1318 = vmatpush1.msra.mxu0 0.0
    %1319 = vmatprep.subr.mxu0 0.0
    %1320 = vmatpush1.msra.mxu0 0.0
    %1321 = vmatprep.subr.mxu0 0.0
    %1322 = vmatpush1.msra.mxu0 0.0
    %1323 = vmatprep.subr.mxu0 0.0
    %1324 = vmatpush1.msra.mxu0 0.0
    %1325 = vmatprep.subr.mxu0 0.0
    %1326 = vmatpush1.msra.mxu0 0.0
    %1327 = vmatprep.subr.mxu0 0.0
    %1328 = vmatpush1.msra.mxu0 0.0
    %1329 = vmatprep.subr.mxu0 0.0
    %1330 = vmatpush1.msra.mxu0 0.0
    %1331 = vmatprep.mubr.f32.mxu0 0.0
    %v1332 = vand.u32 %v22, 4294901760
    %1333 = vmatmul.mubr.f32.gmra.mrb[0].mxu0 %v1332
    %v1334 = vpop.f32.mrb[0].mxu0
    %v1335 = vadd.f32 %v1248, %v1334
    %v1336 = vpop.f32.mrb[0].mxu0
    %1337 = vdwg.mxu0
    %s1338 = sld [smem:[#allocation2]]
    %v1339 = vstv %s1338
    %v1340 = vadd.f32 %v1335, %v1339
    %vm1341 = vcmask 57344
    %1342 = vst.msk [vmem:[#allocation3] sm:$0x1] %vm1341, %v1340
    // Predicated region
    $region22: #{tpu_custom_call.1} parent=1 // pred_check
      _
    $region23: #{tpu_custom_call.1} parent=1 // pred_check_branch
      %1344 = sbr.rel (0) target = $region25
    $region24: #{tpu_custom_call.1} parent=1 // pred_region
      %s1346 = ssub.s32 16, 16
      %1347 = vsyncadd [#allocation4], %s1346
      %s1349 = sshll.u32 [#allocation3], 4
      %s1350 = int_to_ptr.vmem [resolvable:$true] %s1349
      %1352 = dma.vmem_to_hbm [thread:$0]  %s1350, 16, %s5, [#allocation4]
    $region25: #{tpu_custom_call.1} parent=1 // pred_fallthru
      _
    // Predicated region
    $region26: #{tpu_custom_call.1} parent=1 // pred_check
      _
    $region27: #{tpu_custom_call.1} parent=1 // pred_check_branch
      %1354 = sbr.rel (0) target = $region29
    $region28: #{tpu_custom_call.1} parent=1 // pred_region
      %1355 = dma.done [#allocation4], 16
    $region29: #{tpu_custom_call.1} parent=1 // pred_fallthru
      _
    %1356 = vsyncpa [#allocation4], 1

</llo_original>
